<compile_context>
chip_gen: v6e
topology: v6e:2x2x1
jax: 0.10.0
libtpu: 0.0.40
codegen_flags: <defaults>
</compile_context>

<pallas_src>
import functools
import math

import jax
import jax.numpy as jnp
from jax.experimental import pallas as pl
from jax.experimental.pallas import tpu as pltpu


def _round_up(n: int, m: int) -> int:
    return ((n + m - 1) // m) * m


def sinusoidal_pos_emb_kernel(w_ref, phase_ref, group_ref, x_ref, o_ref, *,
                              rows_per_lane_row):
    """w/phase/group: (1, lane_w) resident tables; x: (block_m, r); o: (block_m, lane_w)."""
    x = x_ref[...]                                    # (block_m, r) f32 timesteps
    w = w_ref[...]                                    # (1, lane_w) tiled frequencies
    phase = phase_ref[...]                            # (1, lane_w) 0 (sin) / pi/2 (cos)

    if rows_per_lane_row == 1:
        # out_dim occupies the lane axis directly (full-width when out_dim % 128 == 0).
        ang = x * w + phase                           # (block_m, out_dim)
    else:
        # Lane-packed layout: lane j holds the embedding column (j % out_dim) of the
        # packed batch row (j // out_dim). Expand x so lane j sees its timestep.
        block_m, lane_w = o_ref.shape
        group = group_ref[...]                        # (1, lane_w) int32: j // out_dim
        x_exp = jnp.broadcast_to(x[:, 0:1], (block_m, lane_w))
        for g in range(1, rows_per_lane_row):         # static, small loop (r <= 64)
            x_exp = jnp.where(group == g, x[:, g:g + 1], x_exp)
        ang = x_exp * w + phase

    o_ref[...] = jnp.sin(ang).astype(o_ref.dtype)     # single lane-dense store


def sinusoidal_pos_emb(x, dim, *, target_block_bytes=4 * 1024 * 1024):
    """x: (B,) timesteps -> (B, 2*(dim//2)) embedding, matching the torch module."""
    assert x.ndim == 1, "expects a 1-D tensor of timesteps"
    half_dim = dim // 2
    assert half_dim >= 2, "dim must be >= 4"
    out_dim = 2 * half_dim
    log_scale = math.log(10000.0) / (half_dim - 1)
    B = x.shape[0]

    # Lane packing factor: pack r batch rows per 128-lane output row when possible.
    r = 128 // out_dim if (out_dim < 128 and 128 % out_dim == 0) else 1
    lane_w = r * out_dim

    # --- Hoisted loop-invariant tables (computed once, resident in VMEM). ----------
    k = jnp.arange(half_dim, dtype=jnp.float32)
    freqs_half = jnp.exp(-log_scale * k)                               # (half_dim,)
    w_row = jnp.tile(jnp.concatenate([freqs_half, freqs_half]), r).reshape(1, lane_w)
    phase_row = jnp.tile(
        jnp.concatenate([jnp.zeros((half_dim,), jnp.float32),
                         jnp.full((half_dim,), 0.5 * math.pi, jnp.float32)]),
        r).reshape(1, lane_w)
    group_row = (jnp.arange(lane_w, dtype=jnp.int32) // out_dim).reshape(1, lane_w)

    # --- Batch layout: pad only to the packing granularity (8 sublanes * r). -------
    B_pad = _round_up(max(B, 1), 8 * r)
    M = B_pad // r                                     # packed rows (multiple of 8)
    x2 = jnp.pad(x.astype(jnp.float32), (0, B_pad - B)).reshape(M, r)

    # --- Tile size by bytes; multiple of 8 rows; keep >= 2 steps when possible. ----
    bytes_per_row = lane_w * 4
    block_m = max(8, min(M, (target_block_bytes // bytes_per_row) // 8 * 8))
    if block_m >= M and M >= 16:
        block_m = _round_up(M // 2, 8)                 # give both v7x TCs some work
    grid = (pl.cdiv(M, block_m),)                      # ragged last block is fine

    out_dtype = x.dtype if jnp.issubdtype(x.dtype, jnp.floating) else jnp.float32
    kernel = functools.partial(sinusoidal_pos_emb_kernel, rows_per_lane_row=r)

    out = pl.pallas_call(
        kernel,
        out_shape=jax.ShapeDtypeStruct((M, lane_w), out_dtype),
        grid=grid,
        in_specs=[pl.BlockSpec((1, lane_w), lambda i: (0, 0)),    # freqs  (resident)
                  pl.BlockSpec((1, lane_w), lambda i: (0, 0)),    # phase  (resident)
                  pl.BlockSpec((1, lane_w), lambda i: (0, 0)),    # group  (resident)
                  pl.BlockSpec((block_m, r), lambda i: (i, 0))],  # timesteps
        out_specs=pl.BlockSpec((block_m, lane_w), lambda i: (i, 0)),
        compiler_params=pltpu.CompilerParams(dimension_semantics=("parallel",)),
    )(w_row, phase_row, group_row, x2)

    # Free contiguous reshape back to the logical (B, out_dim) layout.
    return out.reshape(B_pad, out_dim)[:B]


def reference_forward(x, dim):
    """Pure-JAX reference matching the PyTorch SinusoidalPosEmb.forward."""
    half_dim = dim // 2
    s = math.log(10000.0) / (half_dim - 1)
    freqs = jnp.exp(jnp.arange(half_dim, dtype=jnp.float32) * -s)
    ang = x[:, None].astype(jnp.float32) * freqs[None, :]
    return jnp.concatenate([jnp.sin(ang), jnp.cos(ang)], axis=-1)


if __name__ == "__main__":
    key = jax.random.PRNGKey(0)

    # (B, dim) cases: main small spec'd shape (packed lanes, 1 step),
    # packed lanes with a ragged last block, and the out_dim >= 128 path.
    cases = [(8, 32), (200, 32), (40, 256)]
    for B, dim in cases:
        k = jax.random.fold_in(key, dim * 100003 + B)
        x = jax.random.uniform(k, (B,), dtype=jnp.float32, minval=0.0, maxval=100.0)

        out = jax.block_until_ready(sinusoidal_pos_emb(x, dim))
        ref = jax.block_until_ready(reference_forward(x, dim))

        assert out.shape == ref.shape == (B, 2 * (dim // 2)), (out.shape, ref.shape)
        err = float(jnp.max(jnp.abs(out - ref)))
        assert err < 1e-4, f"mismatch vs JAX reference for B={B}, dim={dim}: {err}"

    print("KERNEL_OK")
</pallas_src>

<mosaic_0001>
module attributes {stable_mosaic.version = 11 : i64} {
  func.func @sinusoidal_pos_emb_kernel(%arg0: i32, %arg1: memref<1x128xf32, #tpu.memory_space<vmem>>, %arg2: memref<1x128xf32, #tpu.memory_space<vmem>>, %arg3: memref<1x128xi32, #tpu.memory_space<vmem>>, %arg4: memref<8x4xf32, #tpu.memory_space<vmem>>, %arg5: memref<8x128xf32, #tpu.memory_space<vmem>>) attributes {dimension_semantics = [#tpu.dimension_semantics<parallel>], iteration_bounds = array<i64: 1>, scalar_prefetch = 0 : i64, scratch_operands = 0 : i64, tpu.core_type = #tpu.core_type<tc>, window_params = [{pipeline_mode = #tpu.pipeline_mode<synchronous>, transform_indices = @transform_0, window_bounds = array<i64: 1, 128>}, {pipeline_mode = #tpu.pipeline_mode<synchronous>, transform_indices = @transform_1, window_bounds = array<i64: 1, 128>}, {pipeline_mode = #tpu.pipeline_mode<synchronous>, transform_indices = @transform_2, window_bounds = array<i64: 1, 128>}, {transform_indices = @transform_3, window_bounds = array<i64: 8, 4>}, {transform_indices = @transform_4, window_bounds = array<i64: 8, 128>}]} {
    %c0 = arith.constant 0 : index
    %c0_0 = arith.constant 0 : index
    %0 = vector.load %arg4[%c0, %c0_0] : memref<8x4xf32, #tpu.memory_space<vmem>>, vector<8x4xf32>
    %c0_1 = arith.constant 0 : index
    %c0_2 = arith.constant 0 : index
    %1 = vector.load %arg1[%c0_1, %c0_2] : memref<1x128xf32, #tpu.memory_space<vmem>>, vector<1x128xf32>
    %c0_3 = arith.constant 0 : index
    %c0_4 = arith.constant 0 : index
    %2 = vector.load %arg2[%c0_3, %c0_4] : memref<1x128xf32, #tpu.memory_space<vmem>>, vector<1x128xf32>
    %c0_5 = arith.constant 0 : index
    %c0_6 = arith.constant 0 : index
    %3 = vector.load %arg3[%c0_5, %c0_6] : memref<1x128xi32, #tpu.memory_space<vmem>>, vector<1x128xi32>
    %4 = vector.extract_strided_slice %0 {offsets = [0, 0], sizes = [8, 1], strides = [1, 1]} : vector<8x4xf32> to vector<8x1xf32>
    %5 = vector.shape_cast %4 : vector<8x1xf32> to vector<8x1xf32>
    %6 = vector.broadcast %5 : vector<8x1xf32> to vector<8x128xf32>
    %c1_i32 = arith.constant 1 : i32
    %7 = vector.broadcast %c1_i32 : i32 to vector<1x128xi32>
    %8 = arith.cmpi eq, %3, %7 : vector<1x128xi32>
    %9 = vector.extract_strided_slice %0 {offsets = [0, 1], sizes = [8, 1], strides = [1, 1]} : vector<8x4xf32> to vector<8x1xf32>
    %10 = vector.shape_cast %8 : vector<1x128xi1> to vector<1x128xi1>
    %11 = vector.broadcast %10 : vector<1x128xi1> to vector<8x128xi1>
    %12 = vector.shape_cast %9 : vector<8x1xf32> to vector<8x1xf32>
    %13 = vector.broadcast %12 : vector<8x1xf32> to vector<8x128xf32>
    %14 = arith.select %11, %13, %6 : vector<8x128xi1>, vector<8x128xf32>
    %c2_i32 = arith.constant 2 : i32
    %15 = vector.broadcast %c2_i32 : i32 to vector<1x128xi32>
    %16 = arith.cmpi eq, %3, %15 : vector<1x128xi32>
    %17 = vector.extract_strided_slice %0 {offsets = [0, 2], sizes = [8, 1], strides = [1, 1]} : vector<8x4xf32> to vector<8x1xf32>
    %18 = vector.shape_cast %16 : vector<1x128xi1> to vector<1x128xi1>
    %19 = vector.broadcast %18 : vector<1x128xi1> to vector<8x128xi1>
    %20 = vector.shape_cast %17 : vector<8x1xf32> to vector<8x1xf32>
    %21 = vector.broadcast %20 : vector<8x1xf32> to vector<8x128xf32>
    %22 = arith.select %19, %21, %14 : vector<8x128xi1>, vector<8x128xf32>
    %c3_i32 = arith.constant 3 : i32
    %23 = vector.broadcast %c3_i32 : i32 to vector<1x128xi32>
    %24 = arith.cmpi eq, %3, %23 : vector<1x128xi32>
    %25 = vector.extract_strided_slice %0 {offsets = [0, 3], sizes = [8, 1], strides = [1, 1]} : vector<8x4xf32> to vector<8x1xf32>
    %26 = vector.shape_cast %24 : vector<1x128xi1> to vector<1x128xi1>
    %27 = vector.broadcast %26 : vector<1x128xi1> to vector<8x128xi1>
    %28 = vector.shape_cast %25 : vector<8x1xf32> to vector<8x1xf32>
    %29 = vector.broadcast %28 : vector<8x1xf32> to vector<8x128xf32>
    %30 = arith.select %27, %29, %22 : vector<8x128xi1>, vector<8x128xf32>
    %31 = vector.broadcast %1 : vector<1x128xf32> to vector<8x128xf32>
    %32 = arith.mulf %30, %31 : vector<8x128xf32>
    %33 = vector.broadcast %2 : vector<1x128xf32> to vector<8x128xf32>
    %34 = arith.addf %32, %33 : vector<8x128xf32>
    %35 = math.sin %34 : vector<8x128xf32>
    %c0_7 = arith.constant 0 : index
    %c0_8 = arith.constant 0 : index
    %36 = vector.load %arg5[%c0_7, %c0_8] : memref<8x128xf32, #tpu.memory_space<vmem>>, vector<8x128xf32>
    tpu.vector_store %arg5[%c0_7, %c0_8], %35 {strides = array<i32>} : memref<8x128xf32, #tpu.memory_space<vmem>>, vector<8x128xf32>,
    return
  }
  func.func @transform_0(%arg0: i32) -> (i32, i32) {
    %c0_i32 = arith.constant 0 : i32
    %c0_i32_0 = arith.constant 0 : i32
    %c0_i32_1 = arith.constant 0 : i32
    return %c0_i32, %c0_i32_0 : i32, i32
  }
  func.func @transform_1(%arg0: i32) -> (i32, i32) {
    %c0_i32 = arith.constant 0 : i32
    %c0_i32_0 = arith.constant 0 : i32
    %c0_i32_1 = arith.constant 0 : i32
    return %c0_i32, %c0_i32_0 : i32, i32
  }
  func.func @transform_2(%arg0: i32) -> (i32, i32) {
    %c0_i32 = arith.constant 0 : i32
    %c0_i32_0 = arith.constant 0 : i32
    %c0_i32_1 = arith.constant 0 : i32
    return %c0_i32, %c0_i32_0 : i32, i32
  }
  func.func @transform_3(%arg0: i32) -> (i32, i32) {
    %c0_i32 = arith.constant 0 : i32
    %c0_i32_0 = arith.constant 0 : i32
    return %arg0, %c0_i32 : i32, i32
  }
  func.func @transform_4(%arg0: i32) -> (i32, i32) {
    %c0_i32 = arith.constant 0 : i32
    %c0_i32_0 = arith.constant 0 : i32
    return %arg0, %c0_i32 : i32, i32
  }
}

</mosaic_0001>

<llo_original>
// kernel: tpu_custom_call.1
$region0: #{tpu_custom_call.1}
  #allocation0 [shape = 'u32[]', space=smem, size = 0x4, offset = 0x4, fixed_abs, tag = 'smem constant byte address 0x4 - core index']
  #allocation1 [shape = 'u32[144,128]{1,0:T(1,128)}', space=vmem, size = 0x12000, scoped, tag = 'internal scratch']
  %s0 = inlined_call_operand.vmem [shape: f32[1,128], index: 0, kind: input, shape index: {}]
  %s1 = inlined_call_operand.vmem [shape: f32[1,128], index: 1, kind: input, shape index: {}]
  %s2 = inlined_call_operand.vmem [shape: s32[1,128], index: 2, kind: input, shape index: {}]
  %s3 = inlined_call_operand.vmem [shape: f32[8,4], index: 3, kind: input, shape index: {}]
  %s4 = inlined_call_operand.hbm [shape: f32[8,128], index: 4, kind: output, shape index: {}]
  %s5 = sld [smem:[#allocation0]]
  $region26: #{tpu_custom_call.1} parent=0
    _
  %s7 = ssub.s32 1, %s5
  %s8 = scalar_select 0, %s7, %s5
  $region1: #{tpu_custom_call.1} parent=0
    #allocation2 [shape = 'u8[4096]{0}', space=vmem, size = 0x1000, scoped, tag = 'output window, operand 0, single buffered']
    #allocation3 [shape = 's32[1]{0}', space=sflag, size = 0x4, scoped, tag = 'scoped memory for tpu_custom_call.1']
    %9 = vsyncpa [#allocation3], 0
    // Predicated region
    $region2: #{tpu_custom_call.1} parent=1 // pred_check
      _
    $region3: #{tpu_custom_call.1} parent=1 // pred_check_branch
      %11 = sbr.rel (0) target = $region5
    $region4: #{tpu_custom_call.1} parent=1 // pred_region
      _
    $region5: #{tpu_custom_call.1} parent=1 // pred_fallthru
      _
    // Predicated region
    $region6: #{tpu_custom_call.1} parent=1 // pred_check
      _
    $region7: #{tpu_custom_call.1} parent=1 // pred_check_branch
      %13 = sbr.rel (0) target = $region9
    $region8: #{tpu_custom_call.1} parent=1 // pred_region
      _
    $region9: #{tpu_custom_call.1} parent=1 // pred_fallthru
      _
    // Predicated region
    $region10: #{tpu_custom_call.1} parent=1 // pred_check
      _
    $region11: #{tpu_custom_call.1} parent=1 // pred_check_branch
      %15 = sbr.rel (0) target = $region13
    $region12: #{tpu_custom_call.1} parent=1 // pred_region
      _
    $region13: #{tpu_custom_call.1} parent=1 // pred_fallthru
      _
    // Predicated region
    $region14: #{tpu_custom_call.1} parent=1 // pred_check
      _
    $region15: #{tpu_custom_call.1} parent=1 // pred_check_branch
      %17 = sbr.rel (0) target = $region17
    $region16: #{tpu_custom_call.1} parent=1 // pred_region
      _
    $region17: #{tpu_custom_call.1} parent=1 // pred_fallthru
      _
    %v18 = vld [vmem:[%s3] sm:$0xff]
    %v19 = vld [vmem:[%s0] sm:$0x1]
    %v20 = vld [vmem:[%s1] sm:$0x1]
    %v21 = vld [vmem:[%s2] sm:$0x1]
    %23 = vset.pattern.permute.xlu0 0
    %24 = vperm.xlu0 %23, %v18
    %v25 = vpop.permute.xlu0 %24
    %vm27 = vcmp.eq.s32.totalorder %v21, 1
    %v28 = vsel %vm27, 1, 0
    %v29 = vlaneseq
    %v30 = vshrl.u32 %v29, 7
    %v31 = vsub.s32 0, %v30
    %v32 = vrot.slane %v28, %v31
    %vm33 = vcmp.eq.s32.totalorder %v32, 1
    %34 = vset.pattern.permute.xlu0 1
    %35 = vperm.xlu0 %34, %v18
    %v36 = vpop.permute.xlu0 %35
    %v38 = vsel %vm33, %v36, %v25
    %vm39 = vcmp.eq.s32.totalorder %v21, 2
    %v40 = vsel %vm39, 1, 0
    %v41 = vlaneseq
    %v42 = vshrl.u32 %v41, 7
    %v43 = vsub.s32 0, %v42
    %v44 = vrot.slane %v40, %v43
    %vm45 = vcmp.eq.s32.totalorder %v44, 1
    %46 = vset.pattern.permute.xlu0 2
    %47 = vperm.xlu0 %46, %v18
    %v48 = vpop.permute.xlu0 %47
    %v50 = vsel %vm45, %v48, %v38
    %vm51 = vcmp.eq.s32.totalorder %v21, 3
    %v52 = vsel %vm51, 1, 0
    %v53 = vlaneseq
    %v54 = vshrl.u32 %v53, 7
    %v55 = vsub.s32 0, %v54
    %v56 = vrot.slane %v52, %v55
    %vm57 = vcmp.eq.s32.totalorder %v56, 1
    %58 = vset.pattern.permute.xlu0 3
    %59 = vperm.xlu0 %58, %v18
    %v60 = vpop.permute.xlu0 %59
    %v62 = vsel %vm57, %v60, %v50
    %v64 = vlaneseq
    %v65 = vshrl.u32 %v64, 7
    %v66 = vsub.s32 0, %v65
    %v67 = vrot.slane %v19, %v66
    %v69 = vmul.f32 %v62, %v67
    %v71 = vlaneseq
    %v72 = vshrl.u32 %v71, 7
    %v73 = vsub.s32 0, %v72
    %v74 = vrot.slane %v20, %v73
    %v76 = vadd.f32 %v69, %v74
    %v77 = vand.u32 2147483647, %v76
    %vm78 = vcmp.le.f32.partialorder %v77, 0.7853982
    %vm79 = vcmp.lt.s32.totalorder %v76, 0
    %v80 = vand.u32 %v76, 2139095040
    %v81 = vshrl.u32 %v80, 23
    %v82 = vsub.s32 %v81, 127
    %v83 = vand.u32 2147483647, %v76
    %v84 = vand.u32 %v83, 8388607
    %v85 = vor.u32 %v84, 8388608
    %v86 = vsub.s32 0, %v85
    %v87 = vadd.s32 %v82, 1
    %vm88 = vcmp.gt.s32.totalorder %v87, 0
    %v89 = vsel %vm88, %v87, 0
    %v90 = vshrl.u32 %v89, 5
    %v91 = vand.u32 %v89, 31
    %v92 = vsub.s32 32, %v91
    %v93 = vshrl.u32 683565275, %v92
    %v94 = vshll.u32 683565275, %v91
    %v95 = vshrl.u32 2475754826, %v92
    %v96 = vor.u32 %v94, %v95
    %v97 = vshll.u32 2475754826, %v91
    %v98 = vshrl.u32 2131351028, %v92
    %v99 = vor.u32 %v97, %v98
    %v100 = vshll.u32 2131351028, %v91
    %v101 = vshrl.u32 2102212464, %v92
    %v102 = vor.u32 %v100, %v101
    %v103 = vshll.u32 2102212464, %v91
    %v104 = vshrl.u32 920167782, %v92
    %v105 = vor.u32 %v103, %v104
    %v106 = vshll.u32 920167782, %v91
    %v107 = vshrl.u32 1326507024, %v92
    %v108 = vor.u32 %v106, %v107
    %vm109 = vcmp.lt.s32.totalorder %v90, 1
    %vm110 = vcmp.lt.s32.totalorder %v90, 2
    %vm111 = vcmp.lt.s32.totalorder %v90, 3
    %vm112 = vcmp.lt.s32.totalorder %v90, 4
    %v113 = vsel %vm109, %v93, %v96
    %v114 = vsel %vm112, %v102, 2102212464
    %v115 = vsel %vm111, %v99, %v114
    %v116 = vsel %vm110, %v113, %v115
    %v117 = vsel %vm109, %v96, %v99
    %v118 = vsel %vm112, %v105, 920167782
    %v119 = vsel %vm111, %v102, %v118
    %v120 = vsel %vm110, %v117, %v119
    %v121 = vsel %vm109, %v99, %v102
    %v122 = vsel %vm112, %v108, 1326507024
    %v123 = vsel %vm111, %v105, %v122
    %v124 = vsel %vm110, %v121, %v123
    %v125 = vshll.u32 %v85, 8
    %v126 = vmul.u32.u64.compose %v125, %v124
    %v127 = vextract.low.u32 %v126
    %v128 = vextract.high.u32 %v126
    %v129 = vmul.u32.u64.compose %v125, %v120
    %v130 = vextract.low.u32 %v129
    %v131 = vextract.high.u32 %v129
    %v132 = vmul.u32 %v125, %v116
    %v133 = vadd.s32 %v128, %v130
    %vm134 = vc.u32 %v128, %v130
    %v135 = vadd.s32 %v131, 1
    %v136 = vsel %vm134, %v135, %v131
    %v137 = vadd.s32 %v132, %v136
    %v138 = vadd.s32 %v137, 536870912
    %v139 = vshrl.u32 %v138, 30
    %v140 = vshll.u32 %v139, 30
    %v141 = vsub.s32 %v137, %v140
    %vm142 = vcmp.lt.s32.totalorder %v141, 0
    %v143 = vsub.s32 0, %v141
    %v144 = vsel %vm142, %v143, %v141
    %v145 = vclz %v144
    %v146 = vsub.s32 %v145, 2
    %vm147 = vcmp.gt.s32.totalorder 0, %v146
    %v148 = vsel %vm147, 0, %v146
    %v149 = vsub.s32 32, %v148
    %v150 = vshll.u32 %v141, %v148
    %v151 = vshrl.u32 %v133, %v149
    %v152 = vor.u32 %v150, %v151
    %v153 = vsub.s32 4294967266, %v148
    %v154 = vadd.s32 %v153, 127
    %v155 = vshll.u32 %v154, 23
    %v156 = vor.u32 4788187, %v155
    %v157 = vand.u32 2147483647, %v156
    %v159 = vcvt.s32.f32 %v152
    %v160 = vmul.f32 %v159, %v157
    %v161 = vxor.u32 %v160, 2147483648
    %v162 = vsel %vm79, %v161, %v160
    %v163 = vsub.s32 4, %v139
    %v164 = vsel %vm79, %v163, %v139
    %v165 = vsel %vm78, %v76, %v162
    %v166 = vsel %vm78, 0, %v164
    %v167 = vcosq.f32.pop %v165
    %v168 = vsinq.f32.pop %v165
    %vm169 = vweird.f32 %v76
    %v170 = vadd.s32 %v166, 3
    %v171 = vand.u32 %v170, 3
    %vm172 = vcmp.lt.s32.totalorder %v171, 2
    %vm173 = vcmp.eq.s32.totalorder %v171, 0
    %v174 = vxor.u32 %v168, 2147483648
    %v175 = vsel %vm173, %v167, %v174
    %vm176 = vcmp.eq.s32.totalorder %v171, 2
    %v177 = vxor.u32 %v167, 2147483648
    %v178 = vsel %vm176, %v177, %v168
    %v179 = vsel %vm172, %v175, %v178
    %v180 = vsel %vm169, nan, %v179
    %181 = vst [vmem:[#allocation2] sm:$0xff] %v180
    // Predicated region
    $region18: #{tpu_custom_call.1} parent=1 // pred_check
      _
    $region19: #{tpu_custom_call.1} parent=1 // pred_check_branch
      %183 = sbr.rel (0) target = $region21
    $region20: #{tpu_custom_call.1} parent=1 // pred_region
      %s185 = ssub.s32 128, 128
      %186 = vsyncadd [#allocation3], %s185
      %s188 = sshll.u32 [#allocation2], 4
      %s189 = int_to_ptr.vmem [resolvable:$true] %s188
      %191 = dma.vmem_to_hbm [thread:$0]  %s189, 128, %s4, [#allocation3]
    $region21: #{tpu_custom_call.1} parent=1 // pred_fallthru
      _
    // Predicated region
    $region22: #{tpu_custom_call.1} parent=1 // pred_check
      _
    $region23: #{tpu_custom_call.1} parent=1 // pred_check_branch
      %193 = sbr.rel (0) target = $region25
    $region24: #{tpu_custom_call.1} parent=1 // pred_region
      %194 = dma.done [#allocation3], 128
    $region25: #{tpu_custom_call.1} parent=1 // pred_fallthru
      _
    %195 = vsyncpa [#allocation3], 1

</llo_original>
